<compile_context>
chip_gen: v5e
topology: v5e:2x2
jax: 0.10.0
libtpu: 0.0.40
codegen_flags: <defaults>
</compile_context>

<pallas_src>
import math

import jax
import jax.numpy as jnp
from jax.experimental import pallas as pl
from jax.experimental.pallas import tpu as pltpu


def _copy_kernel(x_ref, o_ref):
    # Pure element copy of the current block (mem-bound; no compute).
    o_ref[...] = x_ref[...]


# Per-block VMEM budget.  With double buffering on both input and output the
# footprint is 2 buffers x (in + out) x block = 4x this, i.e. ~8 MiB -- safely
# inside the scoped-VMEM defaults on every generation (16 MiB v5e,
# 32 MiB v6e/v7x, and well under v7x's 64 MiB physical VMEM).
_TARGET_BLOCK_BYTES = 2 * 1024 * 1024
_LANE = 128
_SUBLANE = 8


def flatten_layer(x: jax.Array) -> jax.Array:
    """Pallas implementation of FlattenLayer.forward: x -> (N, prod(rest))."""
    n = x.shape[0]
    f = math.prod(x.shape[1:]) if x.ndim > 1 else 1
    total = n * f
    itemsize = jnp.dtype(x.dtype).itemsize

    # Glue: metadata-only row-major reshape (== torch .view(N, -1)).
    x2d = x.reshape(n, f)
    if total == 0:
        return x2d

    # Advisory: pure mem-bound op (lets XLA overlap it with neighbors).
    cost = pl.CostEstimate(flops=0, transcendentals=0,
                           bytes_accessed=2 * total * itemsize)

    # Preferred path: copy a fully re-flattened (rows, lanes) slab.  lanes is
    # a large multiple of 128 (unmasked, lane-dense vst) and rows is tiled in
    # multiples of 8 (sublane-dense vregs), independent of N and dtype.
    lanes = None
    for cand in (4096, 2048, 1024, 512, 256, _LANE):
        if total % cand == 0:
            lanes = cand
            break

    if lanes is not None:
        rows = total // lanes
        max_rows = max(_TARGET_BLOCK_BYTES // (lanes * itemsize), 1)
        if rows <= max_rows:
            block_r = rows                                  # full extent
        else:
            block_r = max((max_rows // _SUBLANE) * _SUBLANE, _SUBLANE)
        slab = x2d.reshape(rows, lanes)                     # metadata-only
        out = pl.pallas_call(
            _copy_kernel,
            out_shape=jax.ShapeDtypeStruct((rows, lanes), x.dtype),
            grid_spec=pltpu.PrefetchScalarGridSpec(
                num_scalar_prefetch=0,
                grid=(pl.cdiv(rows, block_r),),
                in_specs=[pl.BlockSpec((block_r, lanes), lambda i: (i, 0))],
                out_specs=pl.BlockSpec((block_r, lanes), lambda i: (i, 0)),
            ),
            compiler_params=pltpu.CompilerParams(
                dimension_semantics=("parallel",)),         # 2-TC shard on v7x
            cost_estimate=cost,
        )(slab)
        return out.reshape(n, f)                            # metadata-only

    # Rare fallback (total not a multiple of 128): tile the (N, F) view with a
    # cdiv grid (Pallas masks the ragged edge).  Never a single whole-array
    # block, so VMEM stays bounded regardless of input size.
    block_n = n if n <= 256 else 256          # full extent or multiple of 8
    block_f = f if f <= 2048 else 2048        # full extent or multiple of 128
    return pl.pallas_call(
        _copy_kernel,
        out_shape=jax.ShapeDtypeStruct((n, f), x.dtype),
        grid_spec=pltpu.PrefetchScalarGridSpec(
            num_scalar_prefetch=0,
            grid=(pl.cdiv(n, block_n), pl.cdiv(f, block_f)),
            in_specs=[pl.BlockSpec((block_n, block_f), lambda i, j: (i, j))],
            out_specs=pl.BlockSpec((block_n, block_f), lambda i, j: (i, j)),
        ),
        compiler_params=pltpu.CompilerParams(
            dimension_semantics=("parallel", "parallel")),
        cost_estimate=cost,
    )(x2d)


if __name__ == "__main__":
    key = jax.random.PRNGKey(0)
    # Small NCHW input consistent with a conv-style feature map.
    x = jax.random.normal(key, (2, 4, 16, 16), dtype=jnp.float32)

    out = flatten_layer(x)
    out = jax.block_until_ready(out)

    # Reference check: identical to torch x.view(N, -1) (row-major flatten).
    ref = x.reshape(x.shape[0], -1)
    assert out.shape == (2, 4 * 16 * 16), out.shape
    assert out.dtype == x.dtype
    assert jnp.array_equal(out, ref)

    print("KERNEL_OK")
</pallas_src>

<mosaic_0001>
module attributes {stable_mosaic.version = 11 : i64} {
  func.func @_copy_kernel(%arg0: i32, %arg1: memref<1x2048xf32, #tpu.memory_space<vmem>>, %arg2: memref<1x2048xf32, #tpu.memory_space<vmem>>) attributes {dimension_semantics = [#tpu.dimension_semantics<parallel>], iteration_bounds = array<i64: 1>, scalar_prefetch = 0 : i64, scratch_operands = 0 : i64, tpu.core_type = #tpu.core_type<tc>, window_params = [{transform_indices = @transform_0, window_bounds = array<i64: 1, 2048>}, {transform_indices = @transform_1, window_bounds = array<i64: 1, 2048>}]} {
    %c0 = arith.constant 0 : index
    %c0_0 = arith.constant 0 : index
    %0 = vector.load %arg1[%c0, %c0_0] : memref<1x2048xf32, #tpu.memory_space<vmem>>, vector<1x2048xf32>
    %c0_1 = arith.constant 0 : index
    %c0_2 = arith.constant 0 : index
    %1 = vector.load %arg2[%c0_1, %c0_2] : memref<1x2048xf32, #tpu.memory_space<vmem>>, vector<1x2048xf32>
    tpu.vector_store %arg2[%c0_1, %c0_2], %0 {strides = array<i32>} : memref<1x2048xf32, #tpu.memory_space<vmem>>, vector<1x2048xf32>,
    return
  }
  func.func @transform_0(%arg0: i32) -> (i32, i32) {
    %c0_i32 = arith.constant 0 : i32
    %c0_i32_0 = arith.constant 0 : i32
    return %arg0, %c0_i32 : i32, i32
  }
  func.func @transform_1(%arg0: i32) -> (i32, i32) {
    %c0_i32 = arith.constant 0 : i32
    %c0_i32_0 = arith.constant 0 : i32
    return %arg0, %c0_i32 : i32, i32
  }
}

</mosaic_0001>

<llo_original>
// kernel: tpu_custom_call.1
$region0: #{tpu_custom_call.1}
  #allocation0 [shape = 'u32[]', space=smem, size = 0x4, offset = 0x4, fixed_abs, tag = 'smem constant byte address 0x4 - core index']
  #allocation1 [shape = 'u32[72,128]{1,0:T(1,128)}', space=vmem, size = 0x9000, scoped, tag = 'internal scratch']
  %s0 = inlined_call_operand.hbm [shape: f32[1,2048], index: 0, kind: input, shape index: {}]
  %s1 = inlined_call_operand.hbm [shape: f32[1,2048], index: 1, kind: output, shape index: {}]
  %s2 = sld [smem:[#allocation0]]
  $region18: #{tpu_custom_call.1} parent=0
    _
  %s4 = ssub.s32 1, %s2
  %s5 = scalar_select 0, %s4, %s2
  $region1: #{tpu_custom_call.1} parent=0
    #allocation2 [shape = 'u8[8192]{0}', space=vmem, size = 0x2000, scoped, tag = 'input window, operand 0, single buffered']
    #allocation3 [shape = 's32[1]{0}', space=sflag, size = 0x4, scoped, tag = 'scoped memory for tpu_custom_call.1']
    #allocation4 [shape = 's32[1]{0}', space=sflag, size = 0x4, scoped, tag = 'scoped memory for tpu_custom_call.1']
    #allocation5 [shape = 'u8[8192]{0}', space=vmem, size = 0x2000, scoped, tag = 'output window, operand 0, single buffered']
    %6 = vsyncpa [#allocation3], 0
    %7 = vsyncpa [#allocation4], 0
    // Predicated region
    $region2: #{tpu_custom_call.1} parent=1 // pred_check
      _
    $region3: #{tpu_custom_call.1} parent=1 // pred_check_branch
      %9 = sbr.rel (0) target = $region5
    $region4: #{tpu_custom_call.1} parent=1 // pred_region
      %11 = vsyncadd [#allocation3], 0
      %s13 = sshll.u32 %s0, 4
      %s14 = int_to_ptr.hbm [resolvable:$true] %s13
      %s15 = sshll.u32 [#allocation2], 4
      %s16 = int_to_ptr.vmem [resolvable:$true] %s15
      %18 = dma.hbm_to_vmem [thread:$0]  %s14, 256, %s16, [#allocation3]
    $region5: #{tpu_custom_call.1} parent=1 // pred_fallthru
      _
    // Predicated region
    $region6: #{tpu_custom_call.1} parent=1 // pred_check
      _
    $region7: #{tpu_custom_call.1} parent=1 // pred_check_branch
      %20 = sbr.rel (0) target = $region9
    $region8: #{tpu_custom_call.1} parent=1 // pred_region
      %22 = dma.done [#allocation3], 256
    $region9: #{tpu_custom_call.1} parent=1 // pred_fallthru
      _
    %v23 = vld [vmem:[#allocation2] sm:$0xff]
    %v24 = vld [vmem:[#allocation2 + $0x8] sm:$0xff]
    %25 = vst [vmem:[#allocation5] sm:$0xff] %v23
    %26 = vst [vmem:[#allocation5 + $0x8] sm:$0xff] %v24
    // Predicated region
    $region10: #{tpu_custom_call.1} parent=1 // pred_check
      _
    $region11: #{tpu_custom_call.1} parent=1 // pred_check_branch
      %28 = sbr.rel (0) target = $region13
    $region12: #{tpu_custom_call.1} parent=1 // pred_region
      %30 = vsyncadd [#allocation4], 0
      %s32 = sshll.u32 [#allocation5], 4
      %s33 = int_to_ptr.vmem [resolvable:$true] %s32
      %s34 = sshll.u32 %s1, 4
      %s35 = int_to_ptr.hbm [resolvable:$true] %s34
      %37 = dma.vmem_to_hbm [thread:$0]  %s33, 256, %s35, [#allocation4]
    $region13: #{tpu_custom_call.1} parent=1 // pred_fallthru
      _
    // Predicated region
    $region14: #{tpu_custom_call.1} parent=1 // pred_check
      _
    $region15: #{tpu_custom_call.1} parent=1 // pred_check_branch
      %39 = sbr.rel (0) target = $region17
    $region16: #{tpu_custom_call.1} parent=1 // pred_region
      %41 = dma.done [#allocation4], 256
    $region17: #{tpu_custom_call.1} parent=1 // pred_fallthru
      _
    %42 = vsyncpa [#allocation3], 1
    %43 = vsyncpa [#allocation4], 1

</llo_original>
